<compile_context>
chip_gen: v7x
topology: tpu7x:2x2x1
jax: 0.10.0
libtpu: 0.0.40
codegen_flags: <defaults>
</compile_context>

<pallas_src>
import jax
import jax.numpy as jnp
from jax import lax
from jax.experimental import pallas as pl
from jax.experimental.pallas import tpu as pltpu


def _cross_attn_kernel(x_ref, w_ref, cols_ref, bias_ref, out_ref):
    # x: (2C, HW) f32, rows [0:C) = blur, rows [C:2C) = event (channel-major,
    # HW on the lane axis -> every load/store is lane-dense).
    x = x_ref[0]
    c2, _ = x.shape
    c = c2 // 2

    cols = cols_ref[...]            # (2C, 4) f32: [gamma | beta | temp | pad]
    gamma = cols[:, 0:1]
    beta = cols[:, 1:2]
    temp = cols[:, 2:3]
    bias = bias_ref[...]            # (2C, 2C) f32: 0 in-block, -1e30 off-block

    # --- WithBias LayerNorm over the channel axis (per stream); matches
    #     torch: biased variance, eps = 1e-5.
    def whiten(xs):
        mu = jnp.mean(xs, axis=0, keepdims=True)
        xc = xs - mu
        var = jnp.mean(xc * xc, axis=0, keepdims=True)
        return xc * lax.rsqrt(var + 1e-5)

    x_n = jnp.concatenate([whiten(x[0:c]), whiten(x[c:c2])], axis=0)
    x_n = (x_n * gamma + beta).astype(jnp.bfloat16)

    w = w_ref[...]                  # (8C, 2C) bf16, pre-packed block-diagonal

    # --- fused Q/K/V for both streams: (6C, 2C) @ (2C, HW) -> (6C, HW).
    #     Row layout of the result: [eq; bq; bk; ek; bv; ev].
    qkv = jnp.dot(w[0:6 * c], x_n, preferred_element_type=jnp.float32)

    # --- F.normalize(dim=-1): L2-normalize each channel row over HW.
    def l2norm(v):
        ss = jnp.sum(v * v, axis=-1, keepdims=True)
        return (v * lax.rsqrt(jnp.maximum(ss, 1e-24))).astype(jnp.bfloat16)

    q = l2norm(qkv[0:c2])                       # [eq; bq]
    k = l2norm(qkv[c2:2 * c2])                  # [bk; ek]
    v = qkv[2 * c2:3 * c2].astype(jnp.bfloat16)  # [bv; ev]

    # --- one score matrix for both branches: (2C, HW) x (2C, HW)^T -> (2C, 2C)
    scores = lax.dot_general(q, k, (((1,), (1,)), ((), ())),
                             preferred_element_type=jnp.float32)
    s = scores * temp + bias                    # temperature + block-diag mask
    m = jnp.max(s, axis=-1, keepdims=True)
    e = jnp.exp(s - m)                          # off-block entries -> exactly 0
    p = e / jnp.sum(e, axis=-1, keepdims=True)  # exact division (tight parity)

    # --- attention output + both output projections (block-diagonal).
    res = jnp.dot(p.astype(jnp.bfloat16), v, preferred_element_type=jnp.float32)
    out = jnp.dot(w[6 * c:8 * c], res.astype(jnp.bfloat16),
                  preferred_element_type=jnp.float32)
    out_ref[0] = out.astype(out_ref.dtype)      # (2C, HW) lane-dense store


def cross_attention_2(blur, event, params, num_heads=4):
    """blur, event: (B, C, H, W) -> (blur_res, event_res), each (B, C, H, W)."""
    assert blur.shape == event.shape
    b, c, h, w = blur.shape
    hw = h * w
    ch = c // num_heads
    c2 = 2 * c

    # channel-major stacked slab: plain reshapes + one cheap concat, no
    # NCHW<->NHWC transposes anywhere.
    x = jnp.concatenate([blur.reshape(b, c, hw), event.reshape(b, c, hw)],
                        axis=1)                              # (B, 2C, HW)

    zero = jnp.zeros((c, c), jnp.float32)

    # Block-diagonal fused weights.  Input columns: [blur_n | event_n].
    # Output rows of the QKV block: [eq; bq; bk; ek; bv; ev].
    wqkv = jnp.concatenate([
        jnp.concatenate([zero, params['wq_e']], axis=1),     # eq <- event_n
        jnp.concatenate([params['wq_b'], zero], axis=1),     # bq <- blur_n
        jnp.concatenate([params['wk_b'], zero], axis=1),     # bk <- blur_n
        jnp.concatenate([zero, params['wk_e']], axis=1),     # ek <- event_n
        jnp.concatenate([params['wv_b'], zero], axis=1),     # bv <- blur_n
        jnp.concatenate([zero, params['wv_e']], axis=1),     # ev <- event_n
    ], axis=0)                                               # (6C, 2C)
    wout = jnp.concatenate([
        jnp.concatenate([params['wp_b'], zero], axis=1),     # blur projection
        jnp.concatenate([zero, params['wp_e']], axis=1),     # event projection
    ], axis=0)                                               # (2C, 2C)
    w_all = jnp.concatenate([wqkv, wout], axis=0).astype(jnp.bfloat16)  # (8C,2C)

    # Packed per-row parameter columns: gamma | beta | temperature | pad.
    gamma = jnp.concatenate([params['gamma_b'], params['gamma_e']])
    beta = jnp.concatenate([params['beta_b'], params['beta_e']])
    temp = jnp.concatenate([jnp.repeat(params['temp_b'], ch),
                            jnp.repeat(params['temp_e'], ch)])
    cols = jnp.stack([gamma, beta, temp, jnp.zeros_like(gamma)],
                     axis=1).astype(jnp.float32)             # (2C, 4)

    # Additive mask: 0 inside the same (stream, head) block, -1e30 elsewhere.
    # Rows [0:C) = blur branch, rows [C:2C) = event branch; C % ch == 0 so
    # seg = row // ch separates both stream and head simultaneously.
    seg = jnp.arange(c2) // ch
    bias = jnp.where(seg[:, None] == seg[None, :], 0.0, -1e30
                     ).astype(jnp.float32)                   # (2C, 2C)

    x_spec = pl.BlockSpec((1, c2, hw), lambda i: (i, 0, 0))

    out = pl.pallas_call(
        _cross_attn_kernel,
        out_shape=jax.ShapeDtypeStruct((b, c2, hw), blur.dtype),
        grid_spec=pltpu.PrefetchScalarGridSpec(
            num_scalar_prefetch=0,
            grid=(b,),
            in_specs=[
                x_spec,
                pl.BlockSpec((8 * c, c2), lambda i: (0, 0)),   # invariant
                pl.BlockSpec((c2, 4), lambda i: (0, 0)),       # invariant
                pl.BlockSpec((c2, c2), lambda i: (0, 0)),      # invariant
            ],
            out_specs=x_spec),
        compiler_params=pltpu.CompilerParams(
            dimension_semantics=("parallel",)),   # megacore split on v7x
    )(x, w_all, cols, bias)

    blur_res = out[:, :c].reshape(b, c, h, w)
    event_res = out[:, c:].reshape(b, c, h, w)
    return blur_res, event_res


def reference(blur, event, p, num_heads=4):
    """Pure-JAX f32 reimplementation of the PyTorch forward, for verification."""
    b, c, h, w = blur.shape
    hw = h * w
    ch = c // num_heads

    def ln(x, g, bb):
        x3 = jnp.transpose(x, (0, 2, 3, 1)).reshape(b, hw, c)
        mu = x3.mean(-1, keepdims=True)
        var = ((x3 - mu) ** 2).mean(-1, keepdims=True)
        y = (x3 - mu) / jnp.sqrt(var + 1e-5) * g + bb
        return jnp.transpose(y.reshape(b, h, w, c), (0, 3, 1, 2))

    def conv1x1(x, wgt):
        return jnp.einsum('bihw,oi->bohw', x, wgt)

    def heads(x):
        return x.reshape(b, num_heads, ch, hw)

    def l2n(x):
        n = jnp.sqrt(jnp.sum(x * x, axis=-1, keepdims=True))
        return x / jnp.maximum(n, 1e-12)

    blur_n = ln(blur, p['gamma_b'], p['beta_b'])
    event_n = ln(event, p['gamma_e'], p['beta_e'])
    bq = l2n(heads(conv1x1(blur_n, p['wq_b'])))
    bk = l2n(heads(conv1x1(blur_n, p['wk_b'])))
    bv = heads(conv1x1(blur_n, p['wv_b']))
    eq = l2n(heads(conv1x1(event_n, p['wq_e'])))
    ek = l2n(heads(conv1x1(event_n, p['wk_e'])))
    ev = heads(conv1x1(event_n, p['wv_e']))

    att_b = jnp.einsum('bhip,bhjp->bhij', eq, bk) * p['temp_b'][None, :, None, None]
    att_b = jax.nn.softmax(att_b, axis=-1)
    blur_res = jnp.einsum('bhij,bhjp->bhip', att_b, bv).reshape(b, c, h, w)
    blur_res = conv1x1(blur_res, p['wp_b'])

    att_e = jnp.einsum('bhip,bhjp->bhij', bq, ek) * p['temp_e'][None, :, None, None]
    att_e = jax.nn.softmax(att_e, axis=-1)
    event_res = jnp.einsum('bhij,bhjp->bhip', att_e, ev).reshape(b, c, h, w)
    event_res = conv1x1(event_res, p['wp_e'])
    return blur_res, event_res


if __name__ == "__main__":
    B, C, H, W = 2, 16, 16, 16
    NUM_HEADS = 4

    key = jax.random.PRNGKey(0)
    ks = jax.random.split(key, 16)

    params = {
        # LayerNorm (WithBias) params
        'gamma_b': 1.0 + 0.1 * jax.random.normal(ks[0], (C,), jnp.float32),
        'beta_b': 0.1 * jax.random.normal(ks[1], (C,), jnp.float32),
        'gamma_e': 1.0 + 0.1 * jax.random.normal(ks[2], (C,), jnp.float32),
        'beta_e': 0.1 * jax.random.normal(ks[3], (C,), jnp.float32),
        # 1x1 conv weights (out_channels, in_channels), bias=False
        'wq_b': 0.2 * jax.random.normal(ks[4], (C, C), jnp.float32),
        'wk_b': 0.2 * jax.random.normal(ks[5], (C, C), jnp.float32),
        'wv_b': 0.2 * jax.random.normal(ks[6], (C, C), jnp.float32),
        'wp_b': 0.2 * jax.random.normal(ks[7], (C, C), jnp.float32),
        'wq_e': 0.2 * jax.random.normal(ks[8], (C, C), jnp.float32),
        'wk_e': 0.2 * jax.random.normal(ks[9], (C, C), jnp.float32),
        'wv_e': 0.2 * jax.random.normal(ks[10], (C, C), jnp.float32),
        'wp_e': 0.2 * jax.random.normal(ks[11], (C, C), jnp.float32),
        # temperatures (nn.Parameter(torch.ones(heads,1,1)) -> randomized deterministically)
        'temp_b': 1.0 + 0.25 * jax.random.normal(ks[12], (NUM_HEADS,), jnp.float32),
        'temp_e': 1.0 + 0.25 * jax.random.normal(ks[13], (NUM_HEADS,), jnp.float32),
    }

    blur = jax.random.normal(ks[14], (B, C, H, W), jnp.float32)
    event = jax.random.normal(ks[15], (B, C, H, W), jnp.float32)

    blur_res, event_res = cross_attention_2(blur, event, params, num_heads=NUM_HEADS)
    jax.block_until_ready((blur_res, event_res))

    # Tolerance accounts for bf16 MXU operands (f32 accumulation) in the kernel
    # vs. the pure-f32 reference.
    ref_blur, ref_event = reference(blur, event, params, num_heads=NUM_HEADS)
    assert jnp.allclose(blur_res, ref_blur, atol=5e-2, rtol=5e-2), "blur branch mismatch"
    assert jnp.allclose(event_res, ref_event, atol=5e-2, rtol=5e-2), "event branch mismatch"

    print("KERNEL_OK")
</pallas_src>

<mosaic_0001>
module attributes {stable_mosaic.version = 11 : i64} {
  func.func @_cross_attn_kernel(%arg0: i32, %arg1: memref<1x32x256xf32, #tpu.memory_space<vmem>>, %arg2: memref<128x32xbf16, #tpu.memory_space<vmem>>, %arg3: memref<32x4xf32, #tpu.memory_space<vmem>>, %arg4: memref<32x32xf32, #tpu.memory_space<vmem>>, %arg5: memref<1x32x256xf32, #tpu.memory_space<vmem>>) attributes {dimension_semantics = [#tpu.dimension_semantics<parallel>], iteration_bounds = array<i64: 2>, scalar_prefetch = 0 : i64, scratch_operands = 0 : i64, tpu.core_type = #tpu.core_type<tc>, window_params = [{transform_indices = @transform_0, window_bounds = array<i64: 1, 32, 256>}, {pipeline_mode = #tpu.pipeline_mode<synchronous>, transform_indices = @transform_1, window_bounds = array<i64: 128, 32>}, {pipeline_mode = #tpu.pipeline_mode<synchronous>, transform_indices = @transform_2, window_bounds = array<i64: 32, 4>}, {pipeline_mode = #tpu.pipeline_mode<synchronous>, transform_indices = @transform_3, window_bounds = array<i64: 32, 32>}, {transform_indices = @transform_4, window_bounds = array<i64: 1, 32, 256>}]} {
    %c0 = arith.constant 0 : index
    %c0_0 = arith.constant 0 : index
    %c0_1 = arith.constant 0 : index
    %0 = vector.load %arg1[%c0, %c0_0, %c0_1] : memref<1x32x256xf32, #tpu.memory_space<vmem>>, vector<1x32x256xf32>
    %1 = vector.shape_cast %0 : vector<1x32x256xf32> to vector<32x256xf32>
    %c0_2 = arith.constant 0 : index
    %c0_3 = arith.constant 0 : index
    %2 = vector.load %arg3[%c0_2, %c0_3] : memref<32x4xf32, #tpu.memory_space<vmem>>, vector<32x4xf32>
    %3 = vector.extract_strided_slice %2 {offsets = [0, 0], sizes = [32, 1], strides = [1, 1]} : vector<32x4xf32> to vector<32x1xf32>
    %4 = vector.extract_strided_slice %2 {offsets = [0, 1], sizes = [32, 1], strides = [1, 1]} : vector<32x4xf32> to vector<32x1xf32>
    %5 = vector.extract_strided_slice %2 {offsets = [0, 2], sizes = [32, 1], strides = [1, 1]} : vector<32x4xf32> to vector<32x1xf32>
    %c0_4 = arith.constant 0 : index
    %c0_5 = arith.constant 0 : index
    %6 = vector.load %arg4[%c0_4, %c0_5] : memref<32x32xf32, #tpu.memory_space<vmem>>, vector<32x32xf32>
    %7 = vector.extract_strided_slice %1 {offsets = [0, 0], sizes = [16, 256], strides = [1, 1]} : vector<32x256xf32> to vector<16x256xf32>
    %cst = arith.constant dense<0.000000e+00> : vector<256xf32>
    %8 = vector.multi_reduction <add>, %7, %cst [0] : vector<16x256xf32> to vector<256xf32>
    %9 = vector.shape_cast %8 : vector<256xf32> to vector<1x256xf32>
    %cst_6 = arith.constant 1.600000e+01 : f32
    %10 = vector.broadcast %cst_6 : f32 to vector<1x256xf32>
    %11 = arith.divf %9, %10 : vector<1x256xf32>
    %12 = vector.broadcast %11 : vector<1x256xf32> to vector<16x256xf32>
    %13 = arith.subf %7, %12 : vector<16x256xf32>
    %14 = arith.mulf %13, %13 : vector<16x256xf32>
    %cst_7 = arith.constant dense<0.000000e+00> : vector<256xf32>
    %15 = vector.multi_reduction <add>, %14, %cst_7 [0] : vector<16x256xf32> to vector<256xf32>
    %16 = vector.shape_cast %15 : vector<256xf32> to vector<1x256xf32>
    %cst_8 = arith.constant 1.600000e+01 : f32
    %17 = vector.broadcast %cst_8 : f32 to vector<1x256xf32>
    %18 = arith.divf %16, %17 : vector<1x256xf32>
    %cst_9 = arith.constant 9.99999974E-6 : f32
    %19 = vector.broadcast %cst_9 : f32 to vector<1x256xf32>
    %20 = arith.addf %18, %19 : vector<1x256xf32>
    %21 = math.rsqrt %20 : vector<1x256xf32>
    %22 = vector.broadcast %21 : vector<1x256xf32> to vector<16x256xf32>
    %23 = arith.mulf %13, %22 : vector<16x256xf32>
    %24 = vector.extract_strided_slice %1 {offsets = [16, 0], sizes = [16, 256], strides = [1, 1]} : vector<32x256xf32> to vector<16x256xf32>
    %cst_10 = arith.constant dense<0.000000e+00> : vector<256xf32>
    %25 = vector.multi_reduction <add>, %24, %cst_10 [0] : vector<16x256xf32> to vector<256xf32>
    %26 = vector.shape_cast %25 : vector<256xf32> to vector<1x256xf32>
    %cst_11 = arith.constant 1.600000e+01 : f32
    %27 = vector.broadcast %cst_11 : f32 to vector<1x256xf32>
    %28 = arith.divf %26, %27 : vector<1x256xf32>
    %29 = vector.broadcast %28 : vector<1x256xf32> to vector<16x256xf32>
    %30 = arith.subf %24, %29 : vector<16x256xf32>
    %31 = arith.mulf %30, %30 : vector<16x256xf32>
    %cst_12 = arith.constant dense<0.000000e+00> : vector<256xf32>
    %32 = vector.multi_reduction <add>, %31, %cst_12 [0] : vector<16x256xf32> to vector<256xf32>
    %33 = vector.shape_cast %32 : vector<256xf32> to vector<1x256xf32>
    %cst_13 = arith.constant 1.600000e+01 : f32
    %34 = vector.broadcast %cst_13 : f32 to vector<1x256xf32>
    %35 = arith.divf %33, %34 : vector<1x256xf32>
    %cst_14 = arith.constant 9.99999974E-6 : f32
    %36 = vector.broadcast %cst_14 : f32 to vector<1x256xf32>
    %37 = arith.addf %35, %36 : vector<1x256xf32>
    %38 = math.rsqrt %37 : vector<1x256xf32>
    %39 = vector.broadcast %38 : vector<1x256xf32> to vector<16x256xf32>
    %40 = arith.mulf %30, %39 : vector<16x256xf32>
    %41 = tpu.concatenate %23, %40 in 0 : vector<16x256xf32>, vector<16x256xf32> -> vector<32x256xf32>
    %42 = vector.broadcast %3 : vector<32x1xf32> to vector<32x256xf32>
    %43 = arith.mulf %41, %42 : vector<32x256xf32>
    %44 = vector.broadcast %4 : vector<32x1xf32> to vector<32x256xf32>
    %45 = arith.addf %43, %44 : vector<32x256xf32>
    %46 = arith.truncf %45 : vector<32x256xf32> to vector<32x256xbf16>
    %c0_15 = arith.constant 0 : index
    %c0_16 = arith.constant 0 : index
    %47 = vector.load %arg2[%c0_15, %c0_16] : memref<128x32xbf16, #tpu.memory_space<vmem>>, vector<128x32xbf16>
    %48 = vector.extract_strided_slice %47 {offsets = [0, 0], sizes = [96, 32], strides = [1, 1]} : vector<128x32xbf16> to vector<96x32xbf16>
    %cst_17 = arith.constant dense<0.000000e+00> : vector<96x256xf32>
    %49 = tpu.matmul %48, %46, %cst_17 {dimension_numbers = #tpu.dot_dimension_numbers<[1], [0], [0], [1], [0, 0, 1, 1], [], []>} : vector<96x32xbf16>, vector<32x256xbf16>, vector<96x256xf32> -> vector<96x256xf32>
    %50 = vector.extract_strided_slice %49 {offsets = [0, 0], sizes = [32, 256], strides = [1, 1]} : vector<96x256xf32> to vector<32x256xf32>
    %51 = arith.mulf %50, %50 : vector<32x256xf32>
    %cst_18 = arith.constant dense<0.000000e+00> : vector<32xf32>
    %52 = vector.multi_reduction <add>, %51, %cst_18 [1] : vector<32x256xf32> to vector<32xf32>
    %53 = vector.shape_cast %52 : vector<32xf32> to vector<32x1xf32>
    %cst_19 = arith.constant 1.000000e-24 : f32
    %54 = vector.broadcast %cst_19 : f32 to vector<32x1xf32>
    %55 = arith.maximumf %53, %54 : vector<32x1xf32>
    %56 = math.rsqrt %55 : vector<32x1xf32>
    %57 = vector.broadcast %56 : vector<32x1xf32> to vector<32x256xf32>
    %58 = arith.mulf %50, %57 : vector<32x256xf32>
    %59 = arith.truncf %58 : vector<32x256xf32> to vector<32x256xbf16>
    %60 = vector.extract_strided_slice %49 {offsets = [32, 0], sizes = [32, 256], strides = [1, 1]} : vector<96x256xf32> to vector<32x256xf32>
    %61 = arith.mulf %60, %60 : vector<32x256xf32>
    %cst_20 = arith.constant dense<0.000000e+00> : vector<32xf32>
    %62 = vector.multi_reduction <add>, %61, %cst_20 [1] : vector<32x256xf32> to vector<32xf32>
    %63 = vector.shape_cast %62 : vector<32xf32> to vector<32x1xf32>
    %cst_21 = arith.constant 1.000000e-24 : f32
    %64 = vector.broadcast %cst_21 : f32 to vector<32x1xf32>
    %65 = arith.maximumf %63, %64 : vector<32x1xf32>
    %66 = math.rsqrt %65 : vector<32x1xf32>
    %67 = vector.broadcast %66 : vector<32x1xf32> to vector<32x256xf32>
    %68 = arith.mulf %60, %67 : vector<32x256xf32>
    %69 = arith.truncf %68 : vector<32x256xf32> to vector<32x256xbf16>
    %70 = vector.extract_strided_slice %49 {offsets = [64, 0], sizes = [32, 256], strides = [1, 1]} : vector<96x256xf32> to vector<32x256xf32>
    %71 = arith.truncf %70 : vector<32x256xf32> to vector<32x256xbf16>
    %cst_22 = arith.constant dense<0.000000e+00> : vector<32x32xf32>
    %72 = tpu.matmul %59, %69, %cst_22 {dimension_numbers = #tpu.dot_dimension_numbers<[1], [1], [0], [0], [0, 0, 1, 0], [], []>} : vector<32x256xbf16>, vector<32x256xbf16>, vector<32x32xf32> -> vector<32x32xf32>
    %73 = vector.broadcast %5 : vector<32x1xf32> to vector<32x32xf32>
    %74 = arith.mulf %72, %73 : vector<32x32xf32>
    %75 = arith.addf %74, %6 : vector<32x32xf32>
    %cst_23 = arith.constant dense<0xFF800000> : vector<32xf32>
    %76 = vector.multi_reduction <maximumf>, %75, %cst_23 [1] : vector<32x32xf32> to vector<32xf32>
    %77 = vector.shape_cast %76 : vector<32xf32> to vector<32x1xf32>
    %78 = vector.broadcast %77 : vector<32x1xf32> to vector<32x32xf32>
    %79 = arith.subf %75, %78 : vector<32x32xf32>
    %80 = math.exp %79 : vector<32x32xf32>
    %cst_24 = arith.constant dense<0.000000e+00> : vector<32xf32>
    %81 = vector.multi_reduction <add>, %80, %cst_24 [1] : vector<32x32xf32> to vector<32xf32>
    %82 = vector.shape_cast %81 : vector<32xf32> to vector<32x1xf32>
    %83 = vector.broadcast %82 : vector<32x1xf32> to vector<32x32xf32>
    %84 = arith.divf %80, %83 : vector<32x32xf32>
    %85 = arith.truncf %84 : vector<32x32xf32> to vector<32x32xbf16>
    %cst_25 = arith.constant dense<0.000000e+00> : vector<32x256xf32>
    %86 = tpu.matmul %85, %71, %cst_25 {dimension_numbers = #tpu.dot_dimension_numbers<[1], [0], [0], [1], [0, 0, 1, 1], [], []>} : vector<32x32xbf16>, vector<32x256xbf16>, vector<32x256xf32> -> vector<32x256xf32>
    %87 = vector.extract_strided_slice %47 {offsets = [96, 0], sizes = [32, 32], strides = [1, 1]} : vector<128x32xbf16> to vector<32x32xbf16>
    %88 = arith.truncf %86 : vector<32x256xf32> to vector<32x256xbf16>
    %cst_26 = arith.constant dense<0.000000e+00> : vector<32x256xf32>
    %89 = tpu.matmul %87, %88, %cst_26 {dimension_numbers = #tpu.dot_dimension_numbers<[1], [0], [0], [1], [0, 0, 1, 1], [], []>} : vector<32x32xbf16>, vector<32x256xbf16>, vector<32x256xf32> -> vector<32x256xf32>
    %c0_27 = arith.constant 0 : index
    %c0_28 = arith.constant 0 : index
    %c0_29 = arith.constant 0 : index
    %90 = vector.load %arg5[%c0_27, %c0_28, %c0_29] : memref<1x32x256xf32, #tpu.memory_space<vmem>>, vector<1x32x256xf32>
    %91 = vector.shape_cast %90 : vector<1x32x256xf32> to vector<32x256xf32>
    %92 = vector.shape_cast %89 : vector<32x256xf32> to vector<1x32x256xf32>
    tpu.vector_store %arg5[%c0_27, %c0_28, %c0_29], %92 {strides = array<i32>} : memref<1x32x256xf32, #tpu.memory_space<vmem>>, vector<1x32x256xf32>,
    return
  }
  func.func @transform_0(%arg0: i32) -> (i32, i32, i32) {
    %c0_i32 = arith.constant 0 : i32
    %c0_i32_0 = arith.constant 0 : i32
    %c0_i32_1 = arith.constant 0 : i32
    return %arg0, %c0_i32, %c0_i32_0 : i32, i32, i32
  }
  func.func @transform_1(%arg0: i32) -> (i32, i32) {
    %c0_i32 = arith.constant 0 : i32
    %c0_i32_0 = arith.constant 0 : i32
    %c0_i32_1 = arith.constant 0 : i32
    return %c0_i32, %c0_i32_0 : i32, i32
  }
  func.func @transform_2(%arg0: i32) -> (i32, i32) {
    %c0_i32 = arith.constant 0 : i32
    %c0_i32_0 = arith.constant 0 : i32
    %c0_i32_1 = arith.constant 0 : i32
    return %c0_i32, %c0_i32_0 : i32, i32
  }
  func.func @transform_3(%arg0: i32) -> (i32, i32) {
    %c0_i32 = arith.constant 0 : i32
    %c0_i32_0 = arith.constant 0 : i32
    %c0_i32_1 = arith.constant 0 : i32
    return %c0_i32, %c0_i32_0 : i32, i32
  }
  func.func @transform_4(%arg0: i32) -> (i32, i32, i32) {
    %c0_i32 = arith.constant 0 : i32
    %c0_i32_0 = arith.constant 0 : i32
    %c0_i32_1 = arith.constant 0 : i32
    return %arg0, %c0_i32, %c0_i32_0 : i32, i32, i32
  }
}

</mosaic_0001>

<llo_original>
// kernel: tpu_custom_call.1
$region0: #{tpu_custom_call.1}
  #allocation0 [shape = 'u32[]', space=smem, size = 0x4, offset = 0x4, fixed_abs, tag = 'smem constant byte address 0x4 - core index']
  #allocation1 [shape = 'u32[144,128]{1,0:T(1,128)}', space=vmem, size = 0x12000, scoped, tag = 'internal scratch']
  %s0 = inlined_call_operand.hbm [shape: f32[2,32,256], index: 0, kind: input, shape index: {}]
  %s1 = inlined_call_operand.vmem [shape: bf16[128,32], index: 1, kind: input, shape index: {}]
  %s2 = inlined_call_operand.vmem [shape: f32[32,4], index: 2, kind: input, shape index: {}]
  %s3 = inlined_call_operand.vmem [shape: f32[32,32], index: 3, kind: input, shape index: {}]
  %s4 = inlined_call_operand.hbm [shape: f32[2,32,256], index: 4, kind: output, shape index: {}]
  %s5 = sld [smem:[#allocation0]]
  $region53: #{tpu_custom_call.1} parent=0
    _
  %s7 = ssub.s32 1, %s5
  %s8 = scalar_select 0, %s7, %s5
  $region1: #{tpu_custom_call.1} parent=0
    #allocation2 [shape = 'u8[65536]{0}', space=vmem, size = 0x10000, scoped, tag = 'input window, operand 0']
    #allocation3 [shape = 's32[2]{0}', space=sflag, size = 0x8, scoped, tag = 'scoped memory for tpu_custom_call.1']
    #allocation4 [shape = 's32[2]{0}', space=sflag, size = 0x8, scoped, tag = 'scoped memory for tpu_custom_call.1']
    #allocation5 [shape = 'u8[65536]{0}', space=vmem, size = 0x10000, scoped, tag = 'output window, operand 0']
    %9 = vsyncpa [#allocation3], 0
    %s10 = scalar_lea.sflag [#allocation3], 1
    %11 = vsyncpa %s10, 0
    %12 = vsyncpa [#allocation4], 0
    %s13 = scalar_lea.sflag [#allocation4], 1
    %14 = vsyncpa %s13, 0
    loop: start=0, step=1, limit=4
    $region2: #{tpu_custom_call.1} parent=1 // loop_pre_header
      _
    $region3: #{tpu_custom_call.1} parent=1 // loop_header
      %s16 = sphi 0, %s20
      %p17 = scmp.ge.s32.totalorder %s16, 4
      %s26 = sphi 0, %s28
      %s29 = sphi 0, %s26
      %s30 = sphi 0, %s29
      %s46 = sphi 0, %s30
      %s50 = sphi 0, %s50
      %s52 = sphi 0, %s50
      %s53 = sphi 0, %s52
      %s67 = sphi 0, %s53
      %s71 = sphi 0, %s71
      %s73 = sphi 0, %s71
      %s74 = sphi 0, %s73
      %s88 = sphi 0, %s74
      %s92 = sphi 0, %s92
      %s94 = sphi 0, %s92
      %s95 = sphi 0, %s94
      %s109 = sphi 0, %s95
      %s115 = sphi 0, %s117
      %s118 = sphi 0, %s115
      %s119 = sphi 0, %s118
      %s135 = sphi 0, %s119
    $region4: #{tpu_custom_call.1} parent=1 // loop_header_branch
      %19 = sbr.rel (%p17) target = $region8
    $region5: #{tpu_custom_call.1} parent=1 // loop_body
      %s21 = ssub.s32 %s16, 1
      %s22 = ssub.s32 %s16, 2
      %s23 = sadd.s32 %s16, 1
      %s24 = ssub.s32 %s16, %s23
      %p25 = scmp.eq.s32.totalorder %s24, 0
      %s27 = sadd.s32 %s26, 1
      %s28 = scalar_select %p25, %s26, %s27
      %p31 = pneg %p25
      %p32 = scmp.eq.s32.totalorder %s16, 1
      %p33 = por %p31, %p32
      %p34 = scmp.ne.s32.totalorder %s26, %s29
      %p35 = scmp.eq.s32.totalorder %s16, 0
      %p36 = por %p34, %p35
      %p37 = scmp.ne.s32.totalorder %s26, %s29
      %p38 = scmp.eq.s32.totalorder %s21, 1
      %p39 = por %p37, %p38
      %p40 = scmp.ne.s32.totalorder %s29, %s30
      %p41 = scmp.eq.s32.totalorder %s21, 0
      %p42 = por %p40, %p41
      %p43 = scmp.ne.s32.totalorder %s29, %s30
      %p44 = scmp.eq.s32.totalorder %s22, 1
      %p45 = por %p43, %p44
      %p47 = scmp.ne.s32.totalorder %s30, %s46
      %p48 = scmp.eq.s32.totalorder %s22, 0
      %p49 = por %p47, %p48
      %s51 = sadd.s32 %s50, 1
      %p54 = scmp.eq.s32.totalorder %s16, 1
      %p55 = scmp.ne.s32.totalorder %s50, %s52
      %p56 = scmp.eq.s32.totalorder %s16, 0
      %p57 = por %p55, %p56
      %p58 = scmp.ne.s32.totalorder %s50, %s52
      %p59 = scmp.eq.s32.totalorder %s21, 1
      %p60 = por %p58, %p59
      %p61 = scmp.ne.s32.totalorder %s52, %s53
      %p62 = scmp.eq.s32.totalorder %s21, 0
      %p63 = por %p61, %p62
      %p64 = scmp.ne.s32.totalorder %s52, %s53
      %p65 = scmp.eq.s32.totalorder %s22, 1
      %p66 = por %p64, %p65
      %p68 = scmp.ne.s32.totalorder %s53, %s67
      %p69 = scmp.eq.s32.totalorder %s22, 0
      %p70 = por %p68, %p69
      %s72 = sadd.s32 %s71, 1
      %p75 = scmp.eq.s32.totalorder %s16, 1
      %p76 = scmp.ne.s32.totalorder %s71, %s73
      %p77 = scmp.eq.s32.totalorder %s16, 0
      %p78 = por %p76, %p77
      %p79 = scmp.ne.s32.totalorder %s71, %s73
      %p80 = scmp.eq.s32.totalorder %s21, 1
      %p81 = por %p79, %p80
      %p82 = scmp.ne.s32.totalorder %s73, %s74
      %p83 = scmp.eq.s32.totalorder %s21, 0
      %p84 = por %p82, %p83
      %p85 = scmp.ne.s32.totalorder %s73, %s74
      %p86 = scmp.eq.s32.totalorder %s22, 1
      %p87 = por %p85, %p86
      %p89 = scmp.ne.s32.totalorder %s74, %s88
      %p90 = scmp.eq.s32.totalorder %s22, 0
      %p91 = por %p89, %p90
      %s93 = sadd.s32 %s92, 1
      %p96 = scmp.eq.s32.totalorder %s16, 1
      %p97 = scmp.ne.s32.totalorder %s92, %s94
      %p98 = scmp.eq.s32.totalorder %s16, 0
      %p99 = por %p97, %p98
      %p100 = scmp.ne.s32.totalorder %s92, %s94
      %p101 = scmp.eq.s32.totalorder %s21, 1
      %p102 = por %p100, %p101
      %p103 = scmp.ne.s32.totalorder %s94, %s95
      %p104 = scmp.eq.s32.totalorder %s21, 0
      %p105 = por %p103, %p104
      %p106 = scmp.ne.s32.totalorder %s94, %s95
      %p107 = scmp.eq.s32.totalorder %s22, 1
      %p108 = por %p106, %p107
      %p110 = scmp.ne.s32.totalorder %s95, %s109
      %p111 = scmp.eq.s32.totalorder %s22, 0
      %p112 = por %p110, %p111
      %s113 = ssub.s32 %s16, %s23
      %p114 = scmp.eq.s32.totalorder %s113, 0
      %s116 = sadd.s32 %s115, 1
      %s117 = scalar_select %p114, %s115, %s116
      %p120 = pneg %p114
      %p121 = scmp.eq.s32.totalorder %s16, 1
      %p122 = por %p120, %p121
      %p123 = scmp.ne.s32.totalorder %s115, %s118
      %p124 = scmp.eq.s32.totalorder %s16, 0
      %p125 = por %p123, %p124
      %p126 = scmp.ne.s32.totalorder %s115, %s118
      %p127 = scmp.eq.s32.totalorder %s21, 1
      %p128 = por %p126, %p127
      %p129 = scmp.ne.s32.totalorder %s118, %s119
      %p130 = scmp.eq.s32.totalorder %s21, 0
      %p131 = por %p129, %p130
      %p132 = scmp.ne.s32.totalorder %s118, %s119
      %p133 = scmp.eq.s32.totalorder %s22, 1
      %p134 = por %p132, %p133
      %p136 = scmp.ne.s32.totalorder %s119, %s135
      %p137 = scmp.eq.s32.totalorder %s22, 0
      %p138 = por %p136, %p137
      %p139 = scmp.le.s32.totalorder 1, %s16
      %p140 = scmp.lt.s32.totalorder %s16, 3
      %p141 = pnand %p139, %p140
      %p142 = pneg %p141
      // Predicated region
      $region9: #{tpu_custom_call.1} parent=5 // pred_check
        _
      $region10: #{tpu_custom_call.1} parent=5 // pred_check_branch
        %144 = sbr.rel (%p141) target = $region12
      $region11: #{tpu_custom_call.1} parent=5 // pred_region
        %s145 = ssub.s32 %s16, 1
        // Predicated region
        $region13: #{tpu_custom_call.1} parent=11 // pred_check
          %p146 = pneg %p63
        $region14: #{tpu_custom_call.1} parent=11 // pred_check_branch
          %148 = sbr.rel (%p146) target = $region16
        $region15: #{tpu_custom_call.1} parent=11 // pred_region
          _
        $region16: #{tpu_custom_call.1} parent=11 // pred_fallthru
          _
        // Predicated region
        $region17: #{tpu_custom_call.1} parent=11 // pred_check
          %p149 = pneg %p84
        $region18: #{tpu_custom_call.1} parent=11 // pred_check_branch
          %151 = sbr.rel (%p149) target = $region20
        $region19: #{tpu_custom_call.1} parent=11 // pred_region
          _
        $region20: #{tpu_custom_call.1} parent=11 // pred_fallthru
          _
        // Predicated region
        $region21: #{tpu_custom_call.1} parent=11 // pred_check
          %p152 = pneg %p105
        $region22: #{tpu_custom_call.1} parent=11 // pred_check_branch
          %154 = sbr.rel (%p152) target = $region24
        $region23: #{tpu_custom_call.1} parent=11 // pred_region
          _
        $region24: #{tpu_custom_call.1} parent=11 // pred_fallthru
          _
      $region12: #{tpu_custom_call.1} parent=5 // pred_fallthru
        _
      %p155 = scmp.lt.s32.totalorder %s16, 2
      // Predicated region
      $region25: #{tpu_custom_call.1} parent=5 // pred_check
        %p156 = pneg %p155
      $region26: #{tpu_custom_call.1} parent=5 // pred_check_branch
        %158 = sbr.rel (%p156) target = $region28
      $region27: #{tpu_custom_call.1} parent=5 // pred_region
        // Predicated region
        $region29: #{tpu_custom_call.1} parent=27 // pred_check
          %p159 = pneg %p36
        $region30: #{tpu_custom_call.1} parent=27 // pred_check_branch
          %161 = sbr.rel (%p159) target = $region32
        $region31: #{tpu_custom_call.1} parent=27 // pred_region
          %s162 = sand.u32 %s26, 1
          %s163 = scalar_lea.sflag [#allocation3], %s162
          %s164 = sand.u32 %s26, 1
          %s165 = smul.addr %s164, 64
          %s166 = scalar_lea.vmem [#allocation2], %s165
          %s168 = ssub.s32 1024, 1024
          %169 = vsyncadd %s163, %s168
          %s170 = smul.addr %s16, 8
          %s171 = smul.addr %s170, 128
          %s172 = scalar_lea.hbm %s0, %s171
          %s173 = sshll.u32 %s166, 4
          %s174 = int_to_ptr.vmem [resolvable:$true] %s173
          %179 = dma.hbm_to_vmem [thread:$0]  %s172, 1024, %s174, %s163, 256, 256, 16
        $region32: #{tpu_custom_call.1} parent=27 // pred_fallthru
          _
      $region28: #{tpu_custom_call.1} parent=5 // pred_fallthru
        _
      %p180 = scmp.le.s32.totalorder 1, %s16
      %p181 = scmp.lt.s32.totalorder %s16, 3
      %p182 = pnand %p180, %p181
      %p183 = pneg %p182
      // Predicated region
      $region33: #{tpu_custom_call.1} parent=5 // pred_check
        _
      $region34: #{tpu_custom_call.1} parent=5 // pred_check_branch
        %185 = sbr.rel (%p182) target = $region36
      $region35: #{tpu_custom_call.1} parent=5 // pred_region
        %s186 = ssub.s32 %s16, 1
        %s187 = sand.u32 %s29, 1
        %s188 = scalar_lea.sflag [#allocation3], %s187
        %s189 = sand.u32 %s29, 1
        %s190 = smul.addr %s189, 64
        %s191 = scalar_lea.vmem [#allocation2], %s190
        // Predicated region
        $region37: #{tpu_custom_call.1} parent=35 // pred_check
          %p192 = pneg %p42
        $region38: #{tpu_custom_call.1} parent=35 // pred_check_branch
          %194 = sbr.rel (%p192) target = $region40
        $region39: #{tpu_custom_call.1} parent=35 // pred_region
          %195 = dma.done %s188, 1024
        $region40: #{tpu_custom_call.1} parent=35 // pred_fallthru
          _
        %s196 = sand.u32 %s29, 1
        %s197 = scalar_lea.sflag [#allocation3], %s196
        %s198 = sand.u32 %s29, 1
        %s199 = smul.addr %s198, 64
        %s200 = scalar_lea.vmem [#allocation2], %s199
        %p201 = pneg %p42
        %p202 = pneg %p39
        %p203 = pneg %p63
        %p204 = pneg %p60
        %p205 = pneg %p84
        %p206 = pneg %p81
        %p207 = pneg %p105
        %p208 = pneg %p102
        %p209 = pneg %p131
        %p210 = pneg %p128
        %s211 = sand.u32 %s118, 1
        %s212 = scalar_lea.sflag [#allocation4], %s211
        %s213 = sand.u32 %s118, 1
        %s214 = smul.addr %s213, 64
        %s215 = scalar_lea.vmem [#allocation5], %s214
        %v217 = vld [vmem:[%s191] sm:$0xff]
        %v218 = vld [vmem:[%s191 + $0x8] sm:$0xff]
        %v219 = vld [vmem:[%s191 + $0x10] sm:$0xff]
        %v220 = vld [vmem:[%s191 + $0x18] sm:$0xff]
        %v221 = vld [vmem:[%s191 + $0x20] sm:$0xff]
        %v222 = vld [vmem:[%s191 + $0x28] sm:$0xff]
        %v223 = vld [vmem:[%s191 + $0x30] sm:$0xff]
        %v224 = vld [vmem:[%s191 + $0x38] sm:$0xff]
        %v225 = vld [vmem:[%s2] sm:$0xff]
        %v226 = vld [vmem:[%s2 + $0x8] sm:$0xff]
        %v227 = vld [vmem:[%s2 + $0x10] sm:$0xff]
        %v228 = vld [vmem:[%s2 + $0x18] sm:$0xff]
        %v229 = vld [vmem:[%s3] sm:$0xff]
        %v230 = vld [vmem:[%s3 + $0x8] sm:$0xff]
        %v231 = vld [vmem:[%s3 + $0x10] sm:$0xff]
        %v232 = vld [vmem:[%s3 + $0x18] sm:$0xff]
        %v233 = vadd.f32 %v217, %v219
        %v234 = vrot.slane %v233, 4
        %v235 = vadd.f32 %v233, %v234
        %v236 = vrot.slane %v235, 2
        %v237 = vadd.f32 %v235, %v236
        %v238 = vrot.slane %v237, 1
        %v239 = vadd.f32 %v237, %v238
        %v240 = vadd.f32 %v218, %v220
        %v241 = vrot.slane %v240, 4
        %v242 = vadd.f32 %v240, %v241
        %v243 = vrot.slane %v242, 2
        %v244 = vadd.f32 %v242, %v243
        %v245 = vrot.slane %v244, 1
        %v246 = vadd.f32 %v244, %v245
        %v247 = vrcp.pop 16.0
        %v248 = vmul.f32 %v239, %v247
        %v249 = vmul.f32 %v246, %v247
        %v250 = vsub.f32 %v217, %v248
        %v251 = vsub.f32 %v218, %v249
        %v252 = vsub.f32 %v219, %v248
        %v253 = vsub.f32 %v220, %v249
        %v254 = vmul.f32 %v250, %v250
        %v255 = vmul.f32 %v251, %v251
        %v256 = vmul.f32 %v252, %v252
        %v257 = vmul.f32 %v253, %v253
        %v258 = vadd.f32 %v254, %v256
        %v259 = vrot.slane %v258, 4
        %v260 = vadd.f32 %v258, %v259
        %v261 = vrot.slane %v260, 2
        %v262 = vadd.f32 %v260, %v261
        %v263 = vrot.slane %v262, 1
        %v264 = vadd.f32 %v262, %v263
        %v265 = vadd.f32 %v255, %v257
        %v266 = vrot.slane %v265, 4
        %v267 = vadd.f32 %v265, %v266
        %v268 = vrot.slane %v267, 2
        %v269 = vadd.f32 %v267, %v268
        %v270 = vrot.slane %v269, 1
        %v271 = vadd.f32 %v269, %v270
        %v272 = vmul.f32 %v264, %v247
        %v273 = vmul.f32 %v271, %v247
        %v274 = vadd.f32 %v272, 1e-05
        %v275 = vadd.f32 %v273, 1e-05
        %v276 = vrsqrt.pop %v274
        %v277 = vrsqrt.pop %v275
        %v278 = vmul.f32 %v250, %v276
        %v279 = vmul.f32 %v251, %v277
        %v280 = vmul.f32 %v252, %v276
        %v281 = vmul.f32 %v253, %v277
        %v282 = vadd.f32 %v221, %v223
        %v283 = vrot.slane %v282, 4
        %v284 = vadd.f32 %v282, %v283
        %v285 = vrot.slane %v284, 2
        %v286 = vadd.f32 %v284, %v285
        %v287 = vrot.slane %v286, 1
        %v288 = vadd.f32 %v286, %v287
        %v289 = vadd.f32 %v222, %v224
        %v290 = vrot.slane %v289, 4
        %v291 = vadd.f32 %v289, %v290
        %v292 = vrot.slane %v291, 2
        %v293 = vadd.f32 %v291, %v292
        %v294 = vrot.slane %v293, 1
        %v295 = vadd.f32 %v293, %v294
        %v296 = vmul.f32 %v288, %v247
        %v297 = vmul.f32 %v295, %v247
        %v298 = vsub.f32 %v221, %v296
        %v299 = vsub.f32 %v222, %v297
        %v300 = vsub.f32 %v223, %v296
        %v301 = vsub.f32 %v224, %v297
        %v302 = vmul.f32 %v298, %v298
        %v303 = vmul.f32 %v299, %v299
        %v304 = vmul.f32 %v300, %v300
        %v305 = vmul.f32 %v301, %v301
        %v306 = vadd.f32 %v302, %v304
        %v307 = vrot.slane %v306, 4
        %v308 = vadd.f32 %v306, %v307
        %v309 = vrot.slane %v308, 2
        %v310 = vadd.f32 %v308, %v309
        %v311 = vrot.slane %v310, 1
        %v312 = vadd.f32 %v310, %v311
        %v313 = vadd.f32 %v303, %v305
        %v314 = vrot.slane %v313, 4
        %v315 = vadd.f32 %v313, %v314
        %v316 = vrot.slane %v315, 2
        %v317 = vadd.f32 %v315, %v316
        %v318 = vrot.slane %v317, 1
        %v319 = vadd.f32 %v317, %v318
        %v320 = vmul.f32 %v312, %v247
        %v321 = vmul.f32 %v319, %v247
        %v322 = vadd.f32 %v320, 1e-05
        %v323 = vadd.f32 %v321, 1e-05
        %v324 = vrsqrt.pop %v322
        %v325 = vrsqrt.pop %v323
        %v326 = vmul.f32 %v298, %v324
        %v327 = vmul.f32 %v299, %v325
        %v328 = vmul.f32 %v300, %v324
        %v329 = vmul.f32 %v301, %v325
        %331 = vset.pattern.permute.xlu0 0
        %332 = vperm.xlu0 %331, %v225
        %v333 = vpop.permute.xlu0 %332
        %336 = vset.pattern.permute.xlu0 0
        %337 = vperm.xlu0 %336, %v226
        %v338 = vpop.permute.xlu0 %337
        %341 = vset.pattern.permute.xlu0 0
        %342 = vperm.xlu0 %341, %v227
        %v343 = vpop.permute.xlu0 %342
        %346 = vset.pattern.permute.xlu0 0
        %347 = vperm.xlu0 %346, %v228
        %v348 = vpop.permute.xlu0 %347
        %v350 = vmul.f32 %v278, %v333
        %v351 = vmul.f32 %v279, %v333
        %v352 = vmul.f32 %v280, %v338
        %v353 = vmul.f32 %v281, %v338
        %v354 = vmul.f32 %v326, %v343
        %v355 = vmul.f32 %v327, %v343
        %v356 = vmul.f32 %v328, %v348
        %v357 = vmul.f32 %v329, %v348
        %358 = vset.pattern.permute.xlu0 1
        %359 = vperm.xlu0 %358, %v225
        %v360 = vpop.permute.xlu0 %359
        %362 = vset.pattern.permute.xlu0 1
        %363 = vperm.xlu0 %362, %v226
        %v364 = vpop.permute.xlu0 %363
        %366 = vset.pattern.permute.xlu0 1
        %367 = vperm.xlu0 %366, %v227
        %v368 = vpop.permute.xlu0 %367
        %370 = vset.pattern.permute.xlu0 1
        %371 = vperm.xlu0 %370, %v228
        %v372 = vpop.permute.xlu0 %371
        %v374 = vadd.f32 %v350, %v360
        %v375 = vadd.f32 %v351, %v360
        %v376 = vadd.f32 %v352, %v364
        %v377 = vadd.f32 %v353, %v364
        %v378 = vadd.f32 %v354, %v368
        %v379 = vadd.f32 %v355, %v368
        %v380 = vadd.f32 %v356, %v372
        %v381 = vadd.f32 %v357, %v372
        %v382 = vpack.c.bf16 %v376, %v374
        %v383 = vpack.c.bf16 %v377, %v375
        %v384 = vpack.c.bf16 %v380, %v378
        %v385 = vpack.c.bf16 %v381, %v379
        %v386 = vld [vmem:[%s1] sm:$0xf]
        %v387 = vld [vmem:[%s1 + $0x4] sm:$0xf]
        %v388 = vld [vmem:[%s1 + $0x8] sm:$0xf]
        %v389 = vld [vmem:[%s1 + $0xc] sm:$0xf]
        %v390 = vld [vmem:[%s1 + $0x10] sm:$0xf]
        %v391 = vld [vmem:[%s1 + $0x14] sm:$0xf]
        %v392 = vld [vmem:[%s1 + $0x18] sm:$0xf]
        %v393 = vld [vmem:[%s1 + $0x1c] sm:$0xf]
        %v394 = vld [vmem:[%s1 + $0x20] sm:$0xf]
        %v395 = vld [vmem:[%s1 + $0x24] sm:$0xf]
        %v396 = vld [vmem:[%s1 + $0x28] sm:$0xf]
        %v397 = vld [vmem:[%s1 + $0x2c] sm:$0xf]
        %v398 = vld [vmem:[%s1 + $0x30] sm:$0xf]
        %v399 = vld [vmem:[%s1 + $0x34] sm:$0xf]
        %v400 = vld [vmem:[%s1 + $0x38] sm:$0xf]
        %v401 = vld [vmem:[%s1 + $0x3c] sm:$0xf]
        %v414 = vunpack.c.l.b16 %v386
        %v415 = vunpack.c.l.b16 %v387
        %v416 = vunpack.c.l.b16 %v388
        %v417 = vunpack.c.l.b16 %v389
        %v418 = vunpack.c.l.b16 %v390
        %v419 = vunpack.c.l.b16 %v391
        %v420 = vunpack.c.l.b16 %v392
        %v421 = vunpack.c.l.b16 %v393
        %v422 = vunpack.c.l.b16 %v394
        %v423 = vunpack.c.l.b16 %v395
        %v424 = vunpack.c.l.b16 %v396
        %v425 = vunpack.c.l.b16 %v397
        %v426 = vpack.c.b16 %v415, %v414
        %v427 = vpack.c.b16 %v417, %v416
        %v428 = vpack.c.b16 %v419, %v418
        %v429 = vpack.c.b16 %v421, %v420
        %v430 = vpack.c.b16 %v423, %v422
        %v431 = vpack.c.b16 %v425, %v424
        %vm432 = vcmask 261120
        %v434 = vsel %vm432, %v426, 0
        %v437 = vsel %vm432, %v427, 0
        %v440 = vsel %vm432, %v428, 0
        %v443 = vsel %vm432, %v429, 0
        %v446 = vsel %vm432, %v430, 0
        %v449 = vsel %vm432, %v431, 0
        %451 = vmatprep.subr.bf16.mxu0 %v383
        %452 = vmatpush1.bf16.msra.mxu0 %v382
        %453 = vmatprep.subr.bf16.mxu0 %v385
        %454 = vmatpush1.bf16.msra.mxu0 %v384
        %455 = vmatprep.subr.bf16.mxu0 0
        %456 = vmatpush1.bf16.msra.mxu0 0
        %457 = vmatprep.subr.bf16.mxu0 0
        %458 = vmatpush1.bf16.msra.mxu0 0
        %459 = vmatprep.subr.bf16.mxu0 0
        %460 = vmatpush1.bf16.msra.mxu0 0
        %461 = vmatprep.subr.bf16.mxu0 0
        %462 = vmatpush1.bf16.msra.mxu0 0
        %463 = vmatprep.subr.bf16.mxu0 0
        %464 = vmatpush1.bf16.msra.mxu0 0
        %465 = vmatprep.subr.bf16.mxu0 0
        %466 = vmatpush1.bf16.msra.mxu0 0
        %467 = vmatprep.subr.bf16.mxu0 0
        %468 = vmatpush1.bf16.msra.mxu0 0
        %469 = vmatprep.subr.bf16.mxu0 0
        %470 = vmatpush1.bf16.msra.mxu0 0
        %471 = vmatprep.subr.bf16.mxu0 0
        %472 = vmatpush1.bf16.msra.mxu0 0
        %473 = vmatprep.subr.bf16.mxu0 0
        %474 = vmatpush1.bf16.msra.mxu0 0
        %475 = vmatprep.subr.bf16.mxu0 0
        %476 = vmatpush1.bf16.msra.mxu0 0
        %477 = vmatprep.subr.bf16.mxu0 0
        %478 = vmatpush1.bf16.msra.mxu0 0
        %479 = vmatprep.subr.bf16.mxu0 0
        %480 = vmatpush1.bf16.msra.mxu0 0
        %481 = vmatprep.subr.bf16.mxu0 0
        %482 = vmatpush1.bf16.msra.mxu0 0
        %483 = vmatprep.mubr.bf16.mxu0 0
        %484 = vmatmul.mubr.bf16.gmra.mrb[0].mxu0 %v434
        %v485 = vpop.f32.mrb[0].mxu0
        %v486 = vadd.f32 0.0, %v485
        %v487 = vpop.f32.mrb[0].mxu0
        %v488 = vadd.f32 0.0, %v487
        %v489 = vpop.f32.mrb[0].mxu0
        %v490 = vadd.f32 0.0, %v489
        %v491 = vpop.f32.mrb[0].mxu0
        %v492 = vadd.f32 0.0, %v491
        %493 = vmatprep.mubr.bf16.mxu0 0
        %494 = vmatmul.mubr.bf16.gmra.mrb[0].mxu0 %v437
        %v495 = vpop.f32.mrb[0].mxu0
        %v496 = vadd.f32 0.0, %v495
        %v497 = vpop.f32.mrb[0].mxu0
        %v498 = vadd.f32 0.0, %v497
        %v499 = vpop.f32.mrb[0].mxu0
        %v500 = vadd.f32 0.0, %v499
        %v501 = vpop.f32.mrb[0].mxu0
        %v502 = vadd.f32 0.0, %v501
        %503 = vmatprep.mubr.bf16.mxu0 0
        %504 = vmatmul.mubr.bf16.gmra.mrb[0].mxu0 %v440
        %v505 = vpop.f32.mrb[0].mxu0
        %v506 = vadd.f32 0.0, %v505
        %v507 = vpop.f32.mrb[0].mxu0
        %v508 = vadd.f32 0.0, %v507
        %v509 = vpop.f32.mrb[0].mxu0
        %v510 = vadd.f32 0.0, %v509
        %v511 = vpop.f32.mrb[0].mxu0
        %v512 = vadd.f32 0.0, %v511
        %513 = vmatprep.mubr.bf16.mxu0 0
        %514 = vmatmul.mubr.bf16.gmra.mrb[0].mxu0 %v443
        %v515 = vpop.f32.mrb[0].mxu0
        %v516 = vadd.f32 0.0, %v515
        %v517 = vpop.f32.mrb[0].mxu0
        %v518 = vadd.f32 0.0, %v517
        %v519 = vpop.f32.mrb[0].mxu0
        %v520 = vadd.f32 0.0, %v519
        %v521 = vpop.f32.mrb[0].mxu0
        %v522 = vadd.f32 0.0, %v521
        %523 = vmatprep.mubr.bf16.mxu0 0
        %524 = vmatmul.mubr.bf16.gmra.mrb[0].mxu0 %v446
        %v525 = vpop.f32.mrb[0].mxu0
        %v526 = vadd.f32 0.0, %v525
        %v527 = vpop.f32.mrb[0].mxu0
        %v528 = vadd.f32 0.0, %v527
        %v529 = vpop.f32.mrb[0].mxu0
        %v530 = vadd.f32 0.0, %v529
        %v531 = vpop.f32.mrb[0].mxu0
        %v532 = vadd.f32 0.0, %v531
        %533 = vmatprep.mubr.bf16.mxu0 0
        %534 = vmatmul.mubr.bf16.gmra.mrb[0].mxu0 %v449
        %v535 = vpop.f32.mrb[0].mxu0
        %v536 = vadd.f32 0.0, %v535
        %v537 = vpop.f32.mrb[0].mxu0
        %v538 = vadd.f32 0.0, %v537
        %v539 = vpop.f32.mrb[0].mxu0
        %v540 = vadd.f32 0.0, %v539
        %v541 = vpop.f32.mrb[0].mxu0
        %v542 = vadd.f32 0.0, %v541
        %543 = vdwg.mxu0
        %v544 = vmul.f32 %v486, %v486
        %v545 = vmul.f32 %v488, %v488
        %v546 = vmul.f32 %v490, %v490
        %v547 = vmul.f32 %v492, %v492
        %v548 = vmul.f32 %v496, %v496
        %v549 = vmul.f32 %v498, %v498
        %v550 = vmul.f32 %v500, %v500
        %v551 = vmul.f32 %v502, %v502
        %v552 = vadd.f32 %v544, %v545
        %553 = vadd.xlane.f32.xlu0 %v552
        %v554 = vpop.xlane.xlu0 %553
        %v555 = vadd.f32 %v546, %v547
        %556 = vadd.xlane.f32.xlu0 %v555
        %v557 = vpop.xlane.xlu0 %556
        %v558 = vadd.f32 %v548, %v549
        %559 = vadd.xlane.f32.xlu0 %v558
        %v560 = vpop.xlane.xlu0 %559
        %v561 = vadd.f32 %v550, %v551
        %562 = vadd.xlane.f32.xlu0 %v561
        %v563 = vpop.xlane.xlu0 %562
        %v564 = vmax.f32 %v554, 1e-24
        %v565 = vmax.f32 %v557, 1e-24
        %v566 = vmax.f32 %v560, 1e-24
        %v567 = vmax.f32 %v563, 1e-24
        %v568 = vrsqrt.pop %v564
        %v569 = vrsqrt.pop %v565
        %v570 = vrsqrt.pop %v566
        %v571 = vrsqrt.pop %v567
        %v572 = vmul.f32 %v486, %v568
        %v573 = vmul.f32 %v488, %v568
        %v574 = vmul.f32 %v490, %v569
        %v575 = vmul.f32 %v492, %v569
        %v576 = vmul.f32 %v496, %v570
        %v577 = vmul.f32 %v498, %v570
        %v578 = vmul.f32 %v500, %v571
        %v579 = vmul.f32 %v502, %v571
        %v580 = vpack.c.bf16 %v574, %v572
        %v581 = vpack.c.bf16 %v575, %v573
        %v582 = vpack.c.bf16 %v578, %v576
        %v583 = vpack.c.bf16 %v579, %v577
        %v584 = vmul.f32 %v506, %v506
        %v585 = vmul.f32 %v508, %v508
        %v586 = vmul.f32 %v510, %v510
        %v587 = vmul.f32 %v512, %v512
        %v588 = vmul.f32 %v516, %v516
        %v589 = vmul.f32 %v518, %v518
        %v590 = vmul.f32 %v520, %v520
        %v591 = vmul.f32 %v522, %v522
        %v592 = vadd.f32 %v584, %v585
        %593 = vadd.xlane.f32.xlu0 %v592
        %v594 = vpop.xlane.xlu0 %593
        %v595 = vadd.f32 %v586, %v587
        %596 = vadd.xlane.f32.xlu0 %v595
        %v597 = vpop.xlane.xlu0 %596
        %v598 = vadd.f32 %v588, %v589
        %599 = vadd.xlane.f32.xlu0 %v598
        %v600 = vpop.xlane.xlu0 %599
        %v601 = vadd.f32 %v590, %v591
        %602 = vadd.xlane.f32.xlu0 %v601
        %v603 = vpop.xlane.xlu0 %602
        %v604 = vmax.f32 %v594, 1e-24
        %v605 = vmax.f32 %v597, 1e-24
        %v606 = vmax.f32 %v600, 1e-24
        %v607 = vmax.f32 %v603, 1e-24
        %v608 = vrsqrt.pop %v604
        %v609 = vrsqrt.pop %v605
        %v610 = vrsqrt.pop %v606
        %v611 = vrsqrt.pop %v607
        %v612 = vmul.f32 %v506, %v608
        %v613 = vmul.f32 %v508, %v608
        %v614 = vmul.f32 %v510, %v609
        %v615 = vmul.f32 %v512, %v609
        %v616 = vmul.f32 %v516, %v610
        %v617 = vmul.f32 %v518, %v610
        %v618 = vmul.f32 %v520, %v611
        %v619 = vmul.f32 %v522, %v611
        %v620 = vpack.c.bf16 %v614, %v612
        %v621 = vpack.c.bf16 %v615, %v613
        %v622 = vpack.c.bf16 %v618, %v616
        %v623 = vpack.c.bf16 %v619, %v617
        %v624 = vpack.c.bf16 %v530, %v526
        %v625 = vpack.c.bf16 %v532, %v528
        %v626 = vpack.c.bf16 %v540, %v536
        %v627 = vpack.c.bf16 %v542, %v538
        %628 = vmatprep.subr.bf16.mxu0 %v621
        %629 = vmatpush1.bf16.xpose.msra.mxu0 %v620
        %630 = vmatprep.subr.bf16.mxu0 %v623
        %631 = vmatpush1.bf16.xpose.msra.mxu0 %v622
        %632 = vmatprep.subr.bf16.mxu0 0
        %633 = vmatpush1.bf16.xpose.msra.mxu0 0
        %634 = vmatprep.subr.bf16.mxu0 0
        %635 = vmatpush1.bf16.xpose.msra.mxu0 0
        %636 = vmatprep.subr.bf16.mxu0 0
        %637 = vmatpush1.bf16.xpose.msra.mxu0 0
        %638 = vmatprep.subr.bf16.mxu0 0
        %639 = vmatpush1.bf16.xpose.msra.mxu0 0
        %640 = vmatprep.subr.bf16.mxu0 0
        %641 = vmatpush1.bf16.xpose.msra.mxu0 0
        %642 = vmatprep.subr.bf16.mxu0 0
        %643 = vmatpush1.bf16.xpose.msra.mxu0 0
        %644 = vmatprep.subr.bf16.mxu0 0
        %645 = vmatpush1.bf16.xpose.msra.mxu0 0
        %646 = vmatprep.subr.bf16.mxu0 0
        %647 = vmatpush1.bf16.xpose.msra.mxu0 0
        %648 = vmatprep.subr.bf16.mxu0 0
        %649 = vmatpush1.bf16.xpose.msra.mxu0 0
        %650 = vmatprep.subr.bf16.mxu0 0
        %651 = vmatpush1.bf16.xpose.msra.mxu0 0
        %652 = vmatprep.subr.bf16.mxu0 0
        %653 = vmatpush1.bf16.xpose.msra.mxu0 0
        %654 = vmatprep.subr.bf16.mxu0 0
        %655 = vmatpush1.bf16.xpose.msra.mxu0 0
        %656 = vmatprep.subr.bf16.mxu0 0
        %657 = vmatpush1.bf16.xpose.msra.mxu0 0
        %658 = vmatprep.subr.bf16.mxu0 0
        %659 = vmatpush1.bf16.xpose.msra.mxu0 0
        %660 = vmatprep.mubr.bf16.mxu0 %v581
        %661 = vmatmul.mubr.bf16.gmra.mrb[0].mxu0 %v580
        %v662 = vpop.f32.mrb[0].mxu0
        %v663 = vadd.f32 0.0, %v662
        %v664 = vpop.f32.mrb[0].mxu0
        %v665 = vpop.f32.mrb[0].mxu0
        %v666 = vadd.f32 0.0, %v665
        %v667 = vpop.f32.mrb[0].mxu0
        %668 = vmatprep.mubr.bf16.mxu0 %v583
        %669 = vmatmul.mubr.bf16.gmra.mrb[0].mxu0 %v582
        %v670 = vpop.f32.mrb[0].mxu0
        %v671 = vadd.f32 0.0, %v670
        %v672 = vpop.f32.mrb[0].mxu0
        %v673 = vpop.f32.mrb[0].mxu0
        %v674 = vadd.f32 0.0, %v673
        %v675 = vpop.f32.mrb[0].mxu0
        %676 = vdwg.mxu0
        %677 = vset.pattern.permute.xlu0 2
        %678 = vperm.xlu0 %677, %v225
        %v679 = vpop.permute.xlu0 %678
        %681 = vset.pattern.permute.xlu0 2
        %682 = vperm.xlu0 %681, %v226
        %v683 = vpop.permute.xlu0 %682
        %685 = vset.pattern.permute.xlu0 2
        %686 = vperm.xlu0 %685, %v227
        %v687 = vpop.permute.xlu0 %686
        %689 = vset.pattern.permute.xlu0 2
        %690 = vperm.xlu0 %689, %v228
        %v691 = vpop.permute.xlu0 %690
        %v693 = vmul.f32 %v663, %v679
        %v694 = vmul.f32 %v666, %v683
        %v695 = vmul.f32 %v671, %v687
        %v696 = vmul.f32 %v674, %v691
        %v697 = vadd.f32 %v693, %v229
        %v698 = vadd.f32 %v694, %v230
        %v699 = vadd.f32 %v695, %v231
        %v700 = vadd.f32 %v696, %v232
        %v701 = vsel %vm432, %v697, -inf
        %702 = vmax.xlane.f32.xlu0 %v701
        %v703 = vpop.xlane.xlu0 %702
        %v704 = vsel %vm432, %v698, -inf
        %705 = vmax.xlane.f32.xlu0 %v704
        %v706 = vpop.xlane.xlu0 %705
        %v707 = vsel %vm432, %v699, -inf
        %708 = vmax.xlane.f32.xlu0 %v707
        %v709 = vpop.xlane.xlu0 %708
        %v710 = vsel %vm432, %v700, -inf
        %711 = vmax.xlane.f32.xlu0 %v710
        %v712 = vpop.xlane.xlu0 %711
        %v713 = vsub.f32 %v697, %v703
        %v714 = vsub.f32 %v698, %v706
        %v715 = vsub.f32 %v699, %v709
        %v716 = vsub.f32 %v700, %v712
        %v717 = vmul.f32 %v713, 1.442695
        %v718 = vpow.pop %v717
        %v719 = vmul.f32 %v714, 1.442695
        %v720 = vpow.pop %v719
        %v721 = vmul.f32 %v715, 1.442695
        %v722 = vpow.pop %v721
        %v723 = vmul.f32 %v716, 1.442695
        %v724 = vpow.pop %v723
        %v725 = vsel %vm432, %v718, 0.0
        %726 = vadd.xlane.f32.xlu0 %v725
        %v727 = vpop.xlane.xlu0 %726
        %v728 = vsel %vm432, %v720, 0.0
        %729 = vadd.xlane.f32.xlu0 %v728
        %v730 = vpop.xlane.xlu0 %729
        %v731 = vsel %vm432, %v722, 0.0
        %732 = vadd.xlane.f32.xlu0 %v731
        %v733 = vpop.xlane.xlu0 %732
        %v734 = vsel %vm432, %v724, 0.0
        %735 = vadd.xlane.f32.xlu0 %v734
        %v736 = vpop.xlane.xlu0 %735
        %v737 = vrcp.pop %v727
        %v738 = vmul.f32 %v718, %v737
        %v739 = vrcp.pop %v730
        %v740 = vmul.f32 %v720, %v739
        %v741 = vrcp.pop %v733
        %v742 = vmul.f32 %v722, %v741
        %v743 = vrcp.pop %v736
        %v744 = vmul.f32 %v724, %v743
        %v745 = vpack.c.bf16 %v740, %v738
        %v746 = vpack.c.bf16 %v744, %v742
        %v748 = vsel %vm432, %v745, 0
        %v751 = vsel %vm432, %v746, 0
        %753 = vmatprep.subr.bf16.mxu0 %v625
        %754 = vmatpush1.bf16.msra.mxu0 %v624
        %755 = vmatprep.subr.bf16.mxu0 %v627
        %756 = vmatpush1.bf16.msra.mxu0 %v626
        %757 = vmatprep.subr.bf16.mxu0 0
        %758 = vmatpush1.bf16.msra.mxu0 0
        %759 = vmatprep.subr.bf16.mxu0 0
        %760 = vmatpush1.bf16.msra.mxu0 0
        %761 = vmatprep.subr.bf16.mxu0 0
        %762 = vmatpush1.bf16.msra.mxu0 0
        %763 = vmatprep.subr.bf16.mxu0 0
        %764 = vmatpush1.bf16.msra.mxu0 0
        %765 = vmatprep.subr.bf16.mxu0 0
        %766 = vmatpush1.bf16.msra.mxu0 0
        %767 = vmatprep.subr.bf16.mxu0 0
        %768 = vmatpush1.bf16.msra.mxu0 0
        %769 = vmatprep.subr.bf16.mxu0 0
        %770 = vmatpush1.bf16.msra.mxu0 0
        %771 = vmatprep.subr.bf16.mxu0 0
        %772 = vmatpush1.bf16.msra.mxu0 0
        %773 = vmatprep.subr.bf16.mxu0 0
        %774 = vmatpush1.bf16.msra.mxu0 0
        %775 = vmatprep.subr.bf16.mxu0 0
        %776 = vmatpush1.bf16.msra.mxu0 0
        %777 = vmatprep.subr.bf16.mxu0 0
        %778 = vmatpush1.bf16.msra.mxu0 0
        %779 = vmatprep.subr.bf16.mxu0 0
        %780 = vmatpush1.bf16.msra.mxu0 0
        %781 = vmatprep.subr.bf16.mxu0 0
        %782 = vmatpush1.bf16.msra.mxu0 0
        %783 = vmatprep.subr.bf16.mxu0 0
        %784 = vmatpush1.bf16.msra.mxu0 0
        %785 = vmatprep.mubr.bf16.mxu0 0
        %786 = vmatmul.mubr.bf16.gmra.mrb[0].mxu0 %v748
        %v787 = vpop.f32.mrb[0].mxu0
        %v788 = vadd.f32 0.0, %v787
        %v789 = vpop.f32.mrb[0].mxu0
        %v790 = vadd.f32 0.0, %v789
        %v791 = vpop.f32.mrb[0].mxu0
        %v792 = vadd.f32 0.0, %v791
        %v793 = vpop.f32.mrb[0].mxu0
        %v794 = vadd.f32 0.0, %v793
        %795 = vmatprep.mubr.bf16.mxu0 0
        %796 = vmatmul.mubr.bf16.gmra.mrb[0].mxu0 %v751
        %v797 = vpop.f32.mrb[0].mxu0
        %v798 = vadd.f32 0.0, %v797
        %v799 = vpop.f32.mrb[0].mxu0
        %v800 = vadd.f32 0.0, %v799
        %v801 = vpop.f32.mrb[0].mxu0
        %v802 = vadd.f32 0.0, %v801
        %v803 = vpop.f32.mrb[0].mxu0
        %v804 = vadd.f32 0.0, %v803
        %805 = vdwg.mxu0
        %v806 = vpack.c.bf16 %v792, %v788
        %v807 = vpack.c.bf16 %v794, %v790
        %v808 = vpack.c.bf16 %v802, %v798
        %v809 = vpack.c.bf16 %v804, %v800
        %v814 = vunpack.c.l.b16 %v398
        %v815 = vunpack.c.l.b16 %v399
        %v816 = vunpack.c.l.b16 %v400
        %v817 = vunpack.c.l.b16 %v401
        %v818 = vpack.c.b16 %v815, %v814
        %v819 = vpack.c.b16 %v817, %v816
        %v821 = vsel %vm432, %v818, 0
        %v824 = vsel %vm432, %v819, 0
        %826 = vmatprep.subr.bf16.mxu0 %v807
        %827 = vmatpush1.bf16.msra.mxu0 %v806
        %828 = vmatprep.subr.bf16.mxu0 %v809
        %829 = vmatpush1.bf16.msra.mxu0 %v808
        %830 = vmatprep.subr.bf16.mxu0 0
        %831 = vmatpush1.bf16.msra.mxu0 0
        %832 = vmatprep.subr.bf16.mxu0 0
        %833 = vmatpush1.bf16.msra.mxu0 0
        %834 = vmatprep.subr.bf16.mxu0 0
        %835 = vmatpush1.bf16.msra.mxu0 0
        %836 = vmatprep.subr.bf16.mxu0 0
        %837 = vmatpush1.bf16.msra.mxu0 0
        %838 = vmatprep.subr.bf16.mxu0 0
        %839 = vmatpush1.bf16.msra.mxu0 0
        %840 = vmatprep.subr.bf16.mxu0 0
        %841 = vmatpush1.bf16.msra.mxu0 0
        %842 = vmatprep.subr.bf16.mxu0 0
        %843 = vmatpush1.bf16.msra.mxu0 0
        %844 = vmatprep.subr.bf16.mxu0 0
        %845 = vmatpush1.bf16.msra.mxu0 0
        %846 = vmatprep.subr.bf16.mxu0 0
        %847 = vmatpush1.bf16.msra.mxu0 0
        %848 = vmatprep.subr.bf16.mxu0 0
        %849 = vmatpush1.bf16.msra.mxu0 0
        %850 = vmatprep.subr.bf16.mxu0 0
        %851 = vmatpush1.bf16.msra.mxu0 0
        %852 = vmatprep.subr.bf16.mxu0 0
        %853 = vmatpush1.bf16.msra.mxu0 0
        %854 = vmatprep.subr.bf16.mxu0 0
        %855 = vmatpush1.bf16.msra.mxu0 0
        %856 = vmatprep.subr.bf16.mxu0 0
        %857 = vmatpush1.bf16.msra.mxu0 0
        %858 = vmatprep.mubr.bf16.mxu0 0
        %859 = vmatmul.mubr.bf16.gmra.mrb[0].mxu0 %v821
        %v860 = vpop.f32.mrb[0].mxu0
        %v861 = vadd.f32 0.0, %v860
        %v862 = vpop.f32.mrb[0].mxu0
        %v863 = vadd.f32 0.0, %v862
        %v864 = vpop.f32.mrb[0].mxu0
        %v865 = vadd.f32 0.0, %v864
        %v866 = vpop.f32.mrb[0].mxu0
        %v867 = vadd.f32 0.0, %v866
        %868 = vmatprep.mubr.bf16.mxu0 0
        %869 = vmatmul.mubr.bf16.gmra.mrb[0].mxu0 %v824
        %v870 = vpop.f32.mrb[0].mxu0
        %v871 = vadd.f32 0.0, %v870
        %v872 = vpop.f32.mrb[0].mxu0
        %v873 = vadd.f32 0.0, %v872
        %v874 = vpop.f32.mrb[0].mxu0
        %v875 = vadd.f32 0.0, %v874
        %v876 = vpop.f32.mrb[0].mxu0
        %v877 = vadd.f32 0.0, %v876
        %878 = vdwg.mxu0
        %879 = vst [vmem:[%s215] sm:$0xff] %v861
        %880 = vst [vmem:[%s215 + $0x8] sm:$0xff] %v863
        %881 = vst [vmem:[%s215 + $0x10] sm:$0xff] %v865
        %882 = vst [vmem:[%s215 + $0x18] sm:$0xff] %v867
        %883 = vst [vmem:[%s215 + $0x20] sm:$0xff] %v871
        %884 = vst [vmem:[%s215 + $0x28] sm:$0xff] %v873
        %885 = vst [vmem:[%s215 + $0x30] sm:$0xff] %v875
        %886 = vst [vmem:[%s215 + $0x38] sm:$0xff] %v877
        %s887 = sand.u32 %s118, 1
        %s888 = scalar_lea.sflag [#allocation4], %s887
        %s889 = sand.u32 %s118, 1
        %s890 = smul.addr %s889, 64
        %s891 = scalar_lea.vmem [#allocation5], %s890
        // Predicated region
        $region41: #{tpu_custom_call.1} parent=35 // pred_check
          %p892 = pneg %p128
        $region42: #{tpu_custom_call.1} parent=35 // pred_check_branch
          %894 = sbr.rel (%p892) target = $region44
        $region43: #{tpu_custom_call.1} parent=35 // pred_region
          %s896 = ssub.s32 1024, 1024
          %897 = vsyncadd %s888, %s896
          %s898 = smul.addr %s21, 8
          %s899 = smul.addr %s898, 128
          %s900 = scalar_lea.hbm %s4, %s899
          %s901 = sshll.u32 %s891, 4
          %s902 = int_to_ptr.vmem [resolvable:$true] %s901
          %907 = dma.vmem_to_hbm [thread:$0]  %s902, 1024, %s900, %s888, 256, 256, 16
        $region44: #{tpu_custom_call.1} parent=35 // pred_fallthru
          _
      $region36: #{tpu_custom_call.1} parent=5 // pred_fallthru
        _
      %p908 = scmp.le.s32.totalorder 2, %s16
      // Predicated region
      $region45: #{tpu_custom_call.1} parent=5 // pred_check
        %p909 = pneg %p908
      $region46: #{tpu_custom_call.1} parent=5 // pred_check_branch
        %911 = sbr.rel (%p909) target = $region48
      $region47: #{tpu_custom_call.1} parent=5 // pred_region
        %s912 = ssub.s32 %s16, 2
        // Predicated region
        $region49: #{tpu_custom_call.1} parent=47 // pred_check
          %p913 = pneg %p134
        $region50: #{tpu_custom_call.1} parent=47 // pred_check_branch
          %915 = sbr.rel (%p913) target = $region52
        $region51: #{tpu_custom_call.1} parent=47 // pred_region
          %s916 = sand.u32 %s119, 1
          %s917 = scalar_lea.sflag [#allocation4], %s916
          %s918 = sand.u32 %s119, 1
          %s919 = smul.addr %s918, 64
          %s920 = scalar_lea.vmem [#allocation5], %s919
          %921 = dma.done %s917, 1024
        $region52: #{tpu_custom_call.1} parent=47 // pred_fallthru
          _
      $region48: #{tpu_custom_call.1} parent=5 // pred_fallthru
        _
    $region6: #{tpu_custom_call.1} parent=1 // loop_footer
      %s20 = sadd.s32 1, %s16
    $region7: #{tpu_custom_call.1} parent=1 // loop_footer_branch
      %15 = sbr.rel target = $region3
    $region8: #{tpu_custom_call.1} parent=1 // loop_exit
      _
    %922 = vsyncpa [#allocation3], 1
    %s923 = scalar_lea.sflag [#allocation3], 1
    %924 = vsyncpa %s923, 1
    %925 = vsyncpa [#allocation4], 1
    %s926 = scalar_lea.sflag [#allocation4], 1
    %927 = vsyncpa %s926, 1

</llo_original>
